<compile_context>
chip_gen: v5e
topology: v5e:2x2
jax: 0.10.0
libtpu: 0.0.40
codegen_flags: <defaults>
</compile_context>

<pallas_src>
import jax
import jax.numpy as jnp
from jax.experimental import pallas as pl
from jax.experimental.pallas import tpu as pltpu

LANE = 128


def _round_up(x, m):
    return ((x + m - 1) // m) * m


def _pad2(x, rows, cols):
    r, c = x.shape
    return jnp.pad(x, ((0, rows - r), (0, cols - c)))


def _pick_tile(n_pad, desired):
    """Largest multiple of 128 that divides n_pad and is <= desired."""
    if desired >= n_pad:
        return n_pad
    t = (desired // 128) * 128
    while t > 128 and n_pad % t != 0:
        t -= 128
    return t


def _tpu_config():
    """Per-generation tile sizes and scoped-VMEM limit."""
    try:
        kind = jax.devices()[0].device_kind.lower()
    except Exception:
        kind = ""
    if "v7" in kind:   # 64 MiB VMEM: keep double-buffered totals well under the cap
        return dict(tm1=256, tk1=1024, tm2=1024, tk2=2048, vmem=48 << 20)
    if "v6" in kind:   # 128 MiB VMEM, 32 MiB default scoped -> raise limit, big tiles
        return dict(tm1=512, tk1=2048, tm2=1024, tk2=2048, vmem=96 << 20)
    if "v5" in kind:   # 128 MiB VMEM, 16 MiB default scoped -> raise limit required
        return dict(tm1=512, tk1=1024, tm2=1024, tk2=2048, vmem=96 << 20)
    return dict(tm1=256, tk1=1024, tm2=512, tk2=1024, vmem=None)   # conservative default


def _cparams(vmem_limit):
    kw = dict(dimension_semantics=("parallel", "arbitrary"))
    if vmem_limit is not None:
        kw["vmem_limit_bytes"] = vmem_limit
    return pltpu.CompilerParams(**kw)


# --------------------- layer 1: aggregate -> fused projections ---------------------

def _layer1_kernel(a_ref, xk_ref, xi_ref, dinv_ref,
                   wout1_ref, wroot1_ref, b1_ref,
                   wout2_ref, wroot2_ref, b2_ref,
                   z2_ref, r2_ref, acc_ref):
    k = pl.program_id(1)

    @pl.when(k == 0)
    def _():
        acc_ref[...] = jnp.zeros_like(acc_ref)

    # acc += (A+I)[i, k] @ X[k]   (int8 tile unpacked to bf16 on VPU; f32 MXU accumulation)
    a_bf = a_ref[...].astype(jnp.float32).astype(jnp.bfloat16)
    acc_ref[...] += jnp.dot(a_bf, xk_ref[...], preferred_element_type=jnp.float32)

    @pl.when(k == pl.num_programs(1) - 1)
    def _():
        # apply D^-1 row scale in f32, then two dots summed (no concat temporary)
        agg = (acc_ref[...] * dinv_ref[...]).astype(jnp.bfloat16)
        h = jnp.dot(agg, wout1_ref[...], preferred_element_type=jnp.float32)
        h = h + jnp.dot(xi_ref[...], wroot1_ref[...], preferred_element_type=jnp.float32)
        h = jnp.maximum(h + b1_ref[...], 0.0)            # relu, f32 epilogue
        h_bf = h.astype(jnp.bfloat16)
        # layer-2 projections fused here so h never touches HBM.
        z2 = jnp.dot(h_bf, wout2_ref[...], preferred_element_type=jnp.float32)
        r2 = jnp.dot(h_bf, wroot2_ref[...], preferred_element_type=jnp.float32)
        z2_ref[...] = z2.astype(z2_ref.dtype)            # bf16: feeds layer-2 MXU
        r2_ref[...] = r2 + b2_ref[...]                   # f32 residual


def _layer1_call(a, x, dinv, w_out1, w_root1, b1, w_out2, w_root2, b2, *, tm, tk, vmem):
    n_pad = a.shape[0]
    f_in_p = x.shape[1]
    f_hid_p = w_out1.shape[1]
    f_out_p = w_out2.shape[1]
    gi, gk = n_pad // tm, n_pad // tk

    flops = (2 * n_pad * n_pad * f_in_p
             + 4 * n_pad * f_in_p * f_hid_p
             + 4 * n_pad * f_hid_p * f_out_p)
    bytes_accessed = (a.size                                    # int8 A, streamed once
                      + x.size * 2 * (gi + 1)                   # xk per row block + xi
                      + (w_out1.size + w_root1.size + w_out2.size + w_root2.size) * 2
                      + n_pad * f_out_p * (2 + 4)               # z2 bf16 + r2 f32
                      + dinv.size * 4)

    return pl.pallas_call(
        _layer1_kernel,
        out_shape=(jax.ShapeDtypeStruct((n_pad, f_out_p), jnp.bfloat16),   # z2
                   jax.ShapeDtypeStruct((n_pad, f_out_p), jnp.float32)),   # r2
        grid=(gi, gk),
        in_specs=[
            pl.BlockSpec((tm, tk), lambda i, k: (i, k)),               # A+I tile (int8)
            pl.BlockSpec((tk, f_in_p), lambda i, k: (k, 0)),           # X rows (aggregation)
            pl.BlockSpec((tm, f_in_p), lambda i, k: (i, 0)),           # X rows (root term)
            pl.BlockSpec((tm, 1), lambda i, k: (i, 0)),                # deg_inv rows (f32)
            pl.BlockSpec((f_in_p, f_hid_p), lambda i, k: (0, 0)),      # W_out1
            pl.BlockSpec((f_in_p, f_hid_p), lambda i, k: (0, 0)),      # W_root1
            pl.BlockSpec((1, f_hid_p), lambda i, k: (0, 0)),           # b1
            pl.BlockSpec((f_hid_p, f_out_p), lambda i, k: (0, 0)),     # W_out2
            pl.BlockSpec((f_hid_p, f_out_p), lambda i, k: (0, 0)),     # W_root2
            pl.BlockSpec((1, f_out_p), lambda i, k: (0, 0)),           # b2
        ],
        out_specs=(pl.BlockSpec((tm, f_out_p), lambda i, k: (i, 0)),
                   pl.BlockSpec((tm, f_out_p), lambda i, k: (i, 0))),
        scratch_shapes=[pltpu.VMEM((tm, f_in_p), jnp.float32)],
        compiler_params=_cparams(vmem),
        cost_estimate=pl.CostEstimate(flops=flops, transcendentals=0,
                                      bytes_accessed=bytes_accessed),
    )(a, x, x, dinv, w_out1, w_root1, b1, w_out2, w_root2, b2)


# --------------------- layer 2: aggregate projected features ---------------------

def _layer2_kernel(a_ref, z_ref, r_ref, dinv_ref, y_ref, acc_ref):
    k = pl.program_id(1)

    @pl.when(k == 0)
    def _():
        acc_ref[...] = jnp.zeros_like(acc_ref)

    a_bf = a_ref[...].astype(jnp.float32).astype(jnp.bfloat16)
    acc_ref[...] += jnp.dot(a_bf, z_ref[...], preferred_element_type=jnp.float32)

    @pl.when(k == pl.num_programs(1) - 1)
    def _():
        y_ref[...] = (acc_ref[...] * dinv_ref[...] + r_ref[...]).astype(y_ref.dtype)


def _layer2_call(a, z, r, dinv, *, tm, tk, vmem):
    n_pad = a.shape[0]
    f_out_p = z.shape[1]
    gi, gk = n_pad // tm, n_pad // tk
    flops = 2 * n_pad * n_pad * f_out_p
    bytes_accessed = (a.size + z.size * 2 * gi + r.size * 4
                      + n_pad * f_out_p * 4 + dinv.size * 4)

    return pl.pallas_call(
        _layer2_kernel,
        out_shape=jax.ShapeDtypeStruct((n_pad, f_out_p), jnp.float32),
        grid=(gi, gk),
        in_specs=[
            pl.BlockSpec((tm, tk), lambda i, k: (i, k)),           # A+I tile (int8)
            pl.BlockSpec((tk, f_out_p), lambda i, k: (k, 0)),      # z2 rows (bf16)
            pl.BlockSpec((tm, f_out_p), lambda i, k: (i, 0)),      # r2 rows (f32)
            pl.BlockSpec((tm, 1), lambda i, k: (i, 0)),            # deg_inv rows (f32)
        ],
        out_specs=pl.BlockSpec((tm, f_out_p), lambda i, k: (i, 0)),
        scratch_shapes=[pltpu.VMEM((tm, f_out_p), jnp.float32)],
        compiler_params=_cparams(vmem),
        cost_estimate=pl.CostEstimate(flops=flops, transcendentals=0,
                                      bytes_accessed=bytes_accessed),
    )(a, z, r, dinv)


# --------------------- small-N path: whole forward in one kernel ---------------------

def _fused_small_kernel(a_ref, x_ref, dinv_ref,
                        wout1_ref, wroot1_ref, b1_ref,
                        wout2_ref, wroot2_ref, b2_ref, y_ref):
    # Everything (A, X, weights) resides in VMEM for one grid step; no z2/r2 HBM round-trip.
    a_bf = a_ref[...].astype(jnp.float32).astype(jnp.bfloat16)
    x = x_ref[...]
    dinv = dinv_ref[...]

    agg1 = jnp.dot(a_bf, x, preferred_element_type=jnp.float32) * dinv
    h = jnp.dot(agg1.astype(jnp.bfloat16), wout1_ref[...],
                preferred_element_type=jnp.float32)
    h = h + jnp.dot(x, wroot1_ref[...], preferred_element_type=jnp.float32)
    h = jnp.maximum(h + b1_ref[...], 0.0)
    h_bf = h.astype(jnp.bfloat16)

    z2 = jnp.dot(h_bf, wout2_ref[...], preferred_element_type=jnp.float32)
    r2 = jnp.dot(h_bf, wroot2_ref[...], preferred_element_type=jnp.float32) + b2_ref[...]
    agg2 = jnp.dot(a_bf, z2.astype(jnp.bfloat16), preferred_element_type=jnp.float32) * dinv
    y_ref[...] = (agg2 + r2).astype(y_ref.dtype)


def _fused_small_call(a, x, dinv, w_out1, w_root1, b1, w_out2, w_root2, b2):
    n_pad = a.shape[0]
    f_out_p = w_out2.shape[1]
    # TODO(synk): on v7x (2 TensorCores) a 2-row-block variant could use both cores, but
    # the single-call fusion (no second launch / no z2,r2 HBM traffic) wins for n<=256.
    return pl.pallas_call(
        _fused_small_kernel,
        out_shape=jax.ShapeDtypeStruct((n_pad, f_out_p), jnp.float32),
    )(a, x, dinv, w_out1, w_root1, b1, w_out2, w_root2, b2)


# ------------------------------- glue / wrappers -------------------------------

def build_adj_and_deginv(edge_index, num_nodes):
    """Dense unnormalized A+I (remove self loops, add self loops) and f32 deg_inv."""
    # TODO(synk): replace dense NxN adjacency with a sparse gather/segment-sum
    # aggregation kernel (scalar-prefetched neighbor offsets) for large graphs.
    src, dst = edge_index[0], edge_index[1]
    nonself = (src != dst).astype(jnp.float32)
    adj = jnp.zeros((num_nodes, num_nodes), jnp.float32)
    adj = adj.at[dst, src].add(nonself)                 # edge j -> i
    adj = adj + jnp.eye(num_nodes, dtype=jnp.float32)   # self loops
    deg = adj.sum(axis=1)
    deg_inv = 1.0 / jnp.maximum(deg, 1.0)
    return adj, deg_inv


def cluster_gcn_forward(x, edge_index, params):
    """Full ClusterGCN.forward: conv1 -> relu -> conv2."""
    n, f_in = x.shape
    f_hid = params["w_out1"].shape[1]
    f_out = params["w_out2"].shape[1]

    f_in_p = _round_up(f_in, LANE)
    f_hid_p = _round_up(f_hid, LANE)
    f_out_p = _round_up(f_out, LANE)

    adj, deg_inv = build_adj_and_deginv(edge_index, n)

    small = n <= 256
    n_pad = _round_up(n, LANE) if small else _round_up(n, 512)

    a = _pad2(adj, n_pad, n_pad).astype(jnp.int8)              # exact 0/1(+) counts
    dinv = _pad2(deg_inv[:, None].astype(jnp.float32), n_pad, 1)
    xp = _pad2(x.astype(jnp.float32), n_pad, f_in_p).astype(jnp.bfloat16)

    w_out1 = _pad2(params["w_out1"], f_in_p, f_hid_p).astype(jnp.bfloat16)
    w_root1 = _pad2(params["w_root1"], f_in_p, f_hid_p).astype(jnp.bfloat16)
    b1 = _pad2(params["b1"].reshape(1, -1), 1, f_hid_p).astype(jnp.float32)
    w_out2 = _pad2(params["w_out2"], f_hid_p, f_out_p).astype(jnp.bfloat16)
    w_root2 = _pad2(params["w_root2"], f_hid_p, f_out_p).astype(jnp.bfloat16)
    b2 = _pad2(params["b2"].reshape(1, -1), 1, f_out_p).astype(jnp.float32)

    if small:
        y = _fused_small_call(a, xp, dinv, w_out1, w_root1, b1, w_out2, w_root2, b2)
    else:
        cfg = _tpu_config()
        tm1 = _pick_tile(n_pad, cfg["tm1"])
        tk1 = _pick_tile(n_pad, cfg["tk1"])
        tm2 = _pick_tile(n_pad, cfg["tm2"])
        tk2 = _pick_tile(n_pad, cfg["tk2"])
        z2, r2 = _layer1_call(a, xp, dinv, w_out1, w_root1, b1, w_out2, w_root2, b2,
                              tm=tm1, tk=tk1, vmem=cfg["vmem"])
        y = _layer2_call(a, z2, r2, dinv, tm=tm2, tk=tk2, vmem=cfg["vmem"])
    return y[:n, :f_out]


def cluster_gcn_reference(x, edge_index, params):
    """Plain-JAX f32 reference for validation."""
    adj, deg_inv = build_adj_and_deginv(edge_index, x.shape[0])
    a = deg_inv[:, None] * adj
    h = jnp.maximum((a @ x) @ params["w_out1"] + params["b1"]
                    + x @ params["w_root1"], 0.0)
    y = (a @ h) @ params["w_out2"] + params["b2"] + h @ params["w_root2"]
    return y


def _glorot(key, fan_in, fan_out):
    lim = (6.0 / (fan_in + fan_out)) ** 0.5
    return jax.random.uniform(key, (fan_in, fan_out), jnp.float32, -lim, lim)


def _make_inputs(key, num_nodes, in_ch, hid_ch, out_ch, num_edges):
    k_x, k_src, k_dst, k1, k2, k3, k4 = jax.random.split(key, 7)
    x = jax.random.normal(k_x, (num_nodes, in_ch), jnp.float32)
    src = jax.random.randint(k_src, (num_edges,), 0, num_nodes)
    dst = jax.random.randint(k_dst, (num_edges,), 0, num_nodes)
    edge_index = jnp.stack([src, dst], axis=0)
    params = {
        "w_out1": _glorot(k1, in_ch, hid_ch),
        "w_root1": _glorot(k2, in_ch, hid_ch),
        "b1": jnp.zeros((1, hid_ch), jnp.float32),
        "w_out2": _glorot(k3, hid_ch, out_ch),
        "w_root2": _glorot(k4, hid_ch, out_ch),
        "b2": jnp.zeros((1, out_ch), jnp.float32),
    }
    return x, edge_index, params


if __name__ == "__main__":
    key = jax.random.PRNGKey(0)
    fwd = jax.jit(cluster_gcn_forward)

    # Small cluster: exercises the fully-fused single-call path.
    in_ch, hid_ch, out_ch = 16, 32, 8
    x_s, ei_s, p_s = _make_inputs(key, 64, in_ch, hid_ch, out_ch, 256)
    y_s = fwd(x_s, ei_s, p_s)
    jax.block_until_ready(y_s)
    assert y_s.shape == (64, out_ch)
    err_s = float(jnp.max(jnp.abs(y_s - cluster_gcn_reference(x_s, ei_s, p_s))))
    assert err_s < 0.1, f"small-path max abs error too large: {err_s}"

    # Larger cluster: exercises the tiled two-call path (int8 A, deg_inv epilogue).
    x_l, ei_l, p_l = _make_inputs(jax.random.PRNGKey(1), 640, in_ch, hid_ch, out_ch, 2560)
    y_l = fwd(x_l, ei_l, p_l)
    jax.block_until_ready(y_l)
    assert y_l.shape == (640, out_ch)
    err_l = float(jnp.max(jnp.abs(y_l - cluster_gcn_reference(x_l, ei_l, p_l))))
    assert err_l < 0.15, f"tiled-path max abs error too large: {err_l}"

    print("KERNEL_OK")
</pallas_src>

<mosaic_0001>
module attributes {stable_mosaic.version = 11 : i64} {
  func.func @_fused_small_kernel(%arg0: memref<128x128xi8, #tpu.memory_space<vmem>>, %arg1: memref<128x128xbf16, #tpu.memory_space<vmem>>, %arg2: memref<128x1xf32, #tpu.memory_space<vmem>>, %arg3: memref<128x128xbf16, #tpu.memory_space<vmem>>, %arg4: memref<128x128xbf16, #tpu.memory_space<vmem>>, %arg5: memref<1x128xf32, #tpu.memory_space<vmem>>, %arg6: memref<128x128xbf16, #tpu.memory_space<vmem>>, %arg7: memref<128x128xbf16, #tpu.memory_space<vmem>>, %arg8: memref<1x128xf32, #tpu.memory_space<vmem>>, %arg9: memref<128x128xf32, #tpu.memory_space<vmem>>) attributes {dimension_semantics = [], scalar_prefetch = 0 : i64, scratch_operands = 0 : i64, tpu.core_type = #tpu.core_type<tc>} {
    %c0 = arith.constant 0 : index
    %c0_0 = arith.constant 0 : index
    %0 = vector.load %arg0[%c0, %c0_0] : memref<128x128xi8, #tpu.memory_space<vmem>>, vector<128x128xi8>
    %1 = arith.sitofp %0 : vector<128x128xi8> to vector<128x128xf32>
    %2 = arith.truncf %1 : vector<128x128xf32> to vector<128x128xbf16>
    %c0_1 = arith.constant 0 : index
    %c0_2 = arith.constant 0 : index
    %3 = vector.load %arg1[%c0_1, %c0_2] : memref<128x128xbf16, #tpu.memory_space<vmem>>, vector<128x128xbf16>
    %c0_3 = arith.constant 0 : index
    %c0_4 = arith.constant 0 : index
    %4 = vector.load %arg2[%c0_3, %c0_4] : memref<128x1xf32, #tpu.memory_space<vmem>>, vector<128x1xf32>
    %cst = arith.constant dense<0.000000e+00> : vector<128x128xf32>
    %5 = tpu.matmul %2, %3, %cst {dimension_numbers = #tpu.dot_dimension_numbers<[1], [0], [0], [1], [0, 0, 1, 1], [], []>} : vector<128x128xbf16>, vector<128x128xbf16>, vector<128x128xf32> -> vector<128x128xf32>
    %6 = vector.broadcast %4 : vector<128x1xf32> to vector<128x128xf32>
    %7 = arith.mulf %5, %6 : vector<128x128xf32>
    %8 = arith.truncf %7 : vector<128x128xf32> to vector<128x128xbf16>
    %c0_5 = arith.constant 0 : index
    %c0_6 = arith.constant 0 : index
    %9 = vector.load %arg3[%c0_5, %c0_6] : memref<128x128xbf16, #tpu.memory_space<vmem>>, vector<128x128xbf16>
    %cst_7 = arith.constant dense<0.000000e+00> : vector<128x128xf32>
    %10 = tpu.matmul %8, %9, %cst_7 {dimension_numbers = #tpu.dot_dimension_numbers<[1], [0], [0], [1], [0, 0, 1, 1], [], []>} : vector<128x128xbf16>, vector<128x128xbf16>, vector<128x128xf32> -> vector<128x128xf32>
    %c0_8 = arith.constant 0 : index
    %c0_9 = arith.constant 0 : index
    %11 = vector.load %arg4[%c0_8, %c0_9] : memref<128x128xbf16, #tpu.memory_space<vmem>>, vector<128x128xbf16>
    %cst_10 = arith.constant dense<0.000000e+00> : vector<128x128xf32>
    %12 = tpu.matmul %3, %11, %cst_10 {dimension_numbers = #tpu.dot_dimension_numbers<[1], [0], [0], [1], [0, 0, 1, 1], [], []>} : vector<128x128xbf16>, vector<128x128xbf16>, vector<128x128xf32> -> vector<128x128xf32>
    %13 = arith.addf %10, %12 : vector<128x128xf32>
    %c0_11 = arith.constant 0 : index
    %c0_12 = arith.constant 0 : index
    %14 = vector.load %arg5[%c0_11, %c0_12] : memref<1x128xf32, #tpu.memory_space<vmem>>, vector<1x128xf32>
    %15 = vector.broadcast %14 : vector<1x128xf32> to vector<128x128xf32>
    %16 = arith.addf %13, %15 : vector<128x128xf32>
    %cst_13 = arith.constant 0.000000e+00 : f32
    %17 = vector.broadcast %cst_13 : f32 to vector<128x128xf32>
    %18 = arith.maximumf %16, %17 : vector<128x128xf32>
    %19 = arith.truncf %18 : vector<128x128xf32> to vector<128x128xbf16>
    %c0_14 = arith.constant 0 : index
    %c0_15 = arith.constant 0 : index
    %20 = vector.load %arg6[%c0_14, %c0_15] : memref<128x128xbf16, #tpu.memory_space<vmem>>, vector<128x128xbf16>
    %cst_16 = arith.constant dense<0.000000e+00> : vector<128x128xf32>
    %21 = tpu.matmul %19, %20, %cst_16 {dimension_numbers = #tpu.dot_dimension_numbers<[1], [0], [0], [1], [0, 0, 1, 1], [], []>} : vector<128x128xbf16>, vector<128x128xbf16>, vector<128x128xf32> -> vector<128x128xf32>
    %c0_17 = arith.constant 0 : index
    %c0_18 = arith.constant 0 : index
    %22 = vector.load %arg7[%c0_17, %c0_18] : memref<128x128xbf16, #tpu.memory_space<vmem>>, vector<128x128xbf16>
    %cst_19 = arith.constant dense<0.000000e+00> : vector<128x128xf32>
    %23 = tpu.matmul %19, %22, %cst_19 {dimension_numbers = #tpu.dot_dimension_numbers<[1], [0], [0], [1], [0, 0, 1, 1], [], []>} : vector<128x128xbf16>, vector<128x128xbf16>, vector<128x128xf32> -> vector<128x128xf32>
    %c0_20 = arith.constant 0 : index
    %c0_21 = arith.constant 0 : index
    %24 = vector.load %arg8[%c0_20, %c0_21] : memref<1x128xf32, #tpu.memory_space<vmem>>, vector<1x128xf32>
    %25 = vector.broadcast %24 : vector<1x128xf32> to vector<128x128xf32>
    %26 = arith.addf %23, %25 : vector<128x128xf32>
    %27 = arith.truncf %21 : vector<128x128xf32> to vector<128x128xbf16>
    %cst_22 = arith.constant dense<0.000000e+00> : vector<128x128xf32>
    %28 = tpu.matmul %2, %27, %cst_22 {dimension_numbers = #tpu.dot_dimension_numbers<[1], [0], [0], [1], [0, 0, 1, 1], [], []>} : vector<128x128xbf16>, vector<128x128xbf16>, vector<128x128xf32> -> vector<128x128xf32>
    %29 = vector.broadcast %4 : vector<128x1xf32> to vector<128x128xf32>
    %30 = arith.mulf %28, %29 : vector<128x128xf32>
    %31 = arith.addf %30, %26 : vector<128x128xf32>
    %c0_23 = arith.constant 0 : index
    %c0_24 = arith.constant 0 : index
    %32 = vector.load %arg9[%c0_23, %c0_24] : memref<128x128xf32, #tpu.memory_space<vmem>>, vector<128x128xf32>
    tpu.vector_store %arg9[%c0_23, %c0_24], %31 {strides = array<i32>} : memref<128x128xf32, #tpu.memory_space<vmem>>, vector<128x128xf32>,
    return
  }
}

</mosaic_0001>

<llo_original>
// kernel: cluster_gcn_forward.1
$region0: #{cluster_gcn_forward.1}
  #allocation0 [shape = 'u32[]', space=smem, size = 0x4, offset = 0x4, fixed_abs, tag = 'smem constant byte address 0x4 - core index']
  #allocation1 [shape = 'u32[72,128]{1,0:T(1,128)}', space=vmem, size = 0x9000, scoped, tag = 'internal scratch']
  %s0 = inlined_call_operand.vmem [shape: s8[128,128], index: 0, kind: input, shape index: {}]
  %s1 = inlined_call_operand.vmem [shape: bf16[128,128], index: 1, kind: input, shape index: {}]
  %s2 = inlined_call_operand.vmem [shape: f32[128,1], index: 2, kind: input, shape index: {}]
  %s3 = inlined_call_operand.vmem [shape: bf16[128,128], index: 3, kind: input, shape index: {}]
  %s4 = inlined_call_operand.vmem [shape: bf16[128,128], index: 4, kind: input, shape index: {}]
  %s5 = inlined_call_operand.vmem [shape: f32[1,128], index: 5, kind: input, shape index: {}]
  %s6 = inlined_call_operand.vmem [shape: bf16[128,128], index: 6, kind: input, shape index: {}]
  %s7 = inlined_call_operand.vmem [shape: bf16[128,128], index: 7, kind: input, shape index: {}]
  %s8 = inlined_call_operand.vmem [shape: f32[1,128], index: 8, kind: input, shape index: {}]
  %s9 = inlined_call_operand.vmem [shape: f32[128,128], index: 9, kind: output, shape index: {}]
  %s10 = sld [smem:[#allocation0]]
  $region46: #{cluster_gcn_forward.1} parent=0
    _
  %s12 = ssub.s32 1, %s10
  %s13 = scalar_select 0, %s12, %s10
  // Predicated region
  $region2: #{cluster_gcn_forward.1} parent=0 // pred_check
    _
  $region3: #{cluster_gcn_forward.1} parent=0 // pred_check_branch
    %15 = sbr.rel (0) target = $region5
  $region4: #{cluster_gcn_forward.1} parent=0 // pred_region
    _
  $region5: #{cluster_gcn_forward.1} parent=0 // pred_fallthru
    _
  // Predicated region
  $region6: #{cluster_gcn_forward.1} parent=0 // pred_check
    _
  $region7: #{cluster_gcn_forward.1} parent=0 // pred_check_branch
    %17 = sbr.rel (0) target = $region9
  $region8: #{cluster_gcn_forward.1} parent=0 // pred_region
    _
  $region9: #{cluster_gcn_forward.1} parent=0 // pred_fallthru
    _
  // Predicated region
  $region10: #{cluster_gcn_forward.1} parent=0 // pred_check
    _
  $region11: #{cluster_gcn_forward.1} parent=0 // pred_check_branch
    %19 = sbr.rel (0) target = $region13
  $region12: #{cluster_gcn_forward.1} parent=0 // pred_region
    _
  $region13: #{cluster_gcn_forward.1} parent=0 // pred_fallthru
    _
  // Predicated region
  $region14: #{cluster_gcn_forward.1} parent=0 // pred_check
    _
  $region15: #{cluster_gcn_forward.1} parent=0 // pred_check_branch
    %21 = sbr.rel (0) target = $region17
  $region16: #{cluster_gcn_forward.1} parent=0 // pred_region
    _
  $region17: #{cluster_gcn_forward.1} parent=0 // pred_fallthru
    _
  // Predicated region
  $region18: #{cluster_gcn_forward.1} parent=0 // pred_check
    _
  $region19: #{cluster_gcn_forward.1} parent=0 // pred_check_branch
    %23 = sbr.rel (0) target = $region21
  $region20: #{cluster_gcn_forward.1} parent=0 // pred_region
    _
  $region21: #{cluster_gcn_forward.1} parent=0 // pred_fallthru
    _
  // Predicated region
  $region22: #{cluster_gcn_forward.1} parent=0 // pred_check
    _
  $region23: #{cluster_gcn_forward.1} parent=0 // pred_check_branch
    %25 = sbr.rel (0) target = $region25
  $region24: #{cluster_gcn_forward.1} parent=0 // pred_region
    _
  $region25: #{cluster_gcn_forward.1} parent=0 // pred_fallthru
    _
  // Predicated region
  $region26: #{cluster_gcn_forward.1} parent=0 // pred_check
    _
  $region27: #{cluster_gcn_forward.1} parent=0 // pred_check_branch
    %27 = sbr.rel (0) target = $region29
  $region28: #{cluster_gcn_forward.1} parent=0 // pred_region
    _
  $region29: #{cluster_gcn_forward.1} parent=0 // pred_fallthru
    _
  // Predicated region
  $region30: #{cluster_gcn_forward.1} parent=0 // pred_check
    _
  $region31: #{cluster_gcn_forward.1} parent=0 // pred_check_branch
    %29 = sbr.rel (0) target = $region33
  $region32: #{cluster_gcn_forward.1} parent=0 // pred_region
    _
  $region33: #{cluster_gcn_forward.1} parent=0 // pred_fallthru
    _
  // Predicated region
  $region34: #{cluster_gcn_forward.1} parent=0 // pred_check
    _
  $region35: #{cluster_gcn_forward.1} parent=0 // pred_check_branch
    %31 = sbr.rel (0) target = $region37
  $region36: #{cluster_gcn_forward.1} parent=0 // pred_region
    _
  $region37: #{cluster_gcn_forward.1} parent=0 // pred_fallthru
    _
  %v32 = vld [vmem:[%s0] sm:$0xff]
  %v33 = vld [vmem:[%s0 + $0x8] sm:$0xff]
  %v34 = vld [vmem:[%s0 + $0x10] sm:$0xff]
  %v35 = vld [vmem:[%s0 + $0x18] sm:$0xff]
  %v36 = vunpack.c.0.s8 %v32
  %v37 = vunpack.c.1.s8 %v32
  %v38 = vunpack.c.2.s8 %v32
  %v39 = vunpack.c.3.s8 %v32
  %v40 = vunpack.c.0.s8 %v33
  %v41 = vunpack.c.1.s8 %v33
  %v42 = vunpack.c.2.s8 %v33
  %v43 = vunpack.c.3.s8 %v33
  %v44 = vunpack.c.0.s8 %v34
  %v45 = vunpack.c.1.s8 %v34
  %v46 = vunpack.c.2.s8 %v34
  %v47 = vunpack.c.3.s8 %v34
  %v48 = vunpack.c.0.s8 %v35
  %v49 = vunpack.c.1.s8 %v35
  %v50 = vunpack.c.2.s8 %v35
  %v51 = vunpack.c.3.s8 %v35
  %v52 = vcvt.s32.f32 %v36
  %v53 = vcvt.s32.f32 %v37
  %v54 = vcvt.s32.f32 %v38
  %v55 = vcvt.s32.f32 %v39
  %v56 = vcvt.s32.f32 %v40
  %v57 = vcvt.s32.f32 %v41
  %v58 = vcvt.s32.f32 %v42
  %v59 = vcvt.s32.f32 %v43
  %v60 = vcvt.s32.f32 %v44
  %v61 = vcvt.s32.f32 %v45
  %v62 = vcvt.s32.f32 %v46
  %v63 = vcvt.s32.f32 %v47
  %v64 = vcvt.s32.f32 %v48
  %v65 = vcvt.s32.f32 %v49
  %v66 = vcvt.s32.f32 %v50
  %v67 = vcvt.s32.f32 %v51
  %v68 = vpack.c.bf16 %v53, %v52
  %v69 = vpack.c.bf16 %v55, %v54
  %v70 = vpack.c.bf16 %v57, %v56
  %v71 = vpack.c.bf16 %v59, %v58
  %v72 = vpack.c.bf16 %v61, %v60
  %v73 = vpack.c.bf16 %v63, %v62
  %v74 = vpack.c.bf16 %v65, %v64
  %v75 = vpack.c.bf16 %v67, %v66
  %v76 = vld [vmem:[%s1] sm:$0xf]
  %v77 = vld [vmem:[%s1 + $0x4] sm:$0xf]
  %v78 = vld [vmem:[%s1 + $0x8] sm:$0xf]
  %v79 = vld [vmem:[%s1 + $0xc] sm:$0xf]
  %v80 = vld [vmem:[%s1 + $0x10] sm:$0xf]
  %v81 = vld [vmem:[%s1 + $0x14] sm:$0xf]
  %v82 = vld [vmem:[%s1 + $0x18] sm:$0xf]
  %v83 = vld [vmem:[%s1 + $0x1c] sm:$0xf]
  %v84 = vld [vmem:[%s1 + $0x20] sm:$0xf]
  %v85 = vld [vmem:[%s1 + $0x24] sm:$0xf]
  %v86 = vld [vmem:[%s1 + $0x28] sm:$0xf]
  %v87 = vld [vmem:[%s1 + $0x2c] sm:$0xf]
  %v88 = vld [vmem:[%s1 + $0x30] sm:$0xf]
  %v89 = vld [vmem:[%s1 + $0x34] sm:$0xf]
  %v90 = vld [vmem:[%s1 + $0x38] sm:$0xf]
  %v91 = vld [vmem:[%s1 + $0x3c] sm:$0xf]
  %v92 = vld [vmem:[%s2] sm:$0xff]
  %v93 = vld [vmem:[%s2 + $0x8] sm:$0xff]
  %v94 = vld [vmem:[%s2 + $0x10] sm:$0xff]
  %v95 = vld [vmem:[%s2 + $0x18] sm:$0xff]
  %v96 = vld [vmem:[%s2 + $0x20] sm:$0xff]
  %v97 = vld [vmem:[%s2 + $0x28] sm:$0xff]
  %v98 = vld [vmem:[%s2 + $0x30] sm:$0xff]
  %v99 = vld [vmem:[%s2 + $0x38] sm:$0xff]
  %v100 = vld [vmem:[%s2 + $0x40] sm:$0xff]
  %v101 = vld [vmem:[%s2 + $0x48] sm:$0xff]
  %v102 = vld [vmem:[%s2 + $0x50] sm:$0xff]
  %v103 = vld [vmem:[%s2 + $0x58] sm:$0xff]
  %v104 = vld [vmem:[%s2 + $0x60] sm:$0xff]
  %v105 = vld [vmem:[%s2 + $0x68] sm:$0xff]
  %v106 = vld [vmem:[%s2 + $0x70] sm:$0xff]
  %v107 = vld [vmem:[%s2 + $0x78] sm:$0xff]
  %v124 = vunpack.c.l.b16 %v76
  %v125 = vunpack.c.l.b16 %v77
  %v126 = vunpack.c.l.b16 %v78
  %v127 = vunpack.c.l.b16 %v79
  %v128 = vunpack.c.l.b16 %v80
  %v129 = vunpack.c.l.b16 %v81
  %v130 = vunpack.c.l.b16 %v82
  %v131 = vunpack.c.l.b16 %v83
  %v132 = vunpack.c.l.b16 %v84
  %v133 = vunpack.c.l.b16 %v85
  %v134 = vunpack.c.l.b16 %v86
  %v135 = vunpack.c.l.b16 %v87
  %v136 = vunpack.c.l.b16 %v88
  %v137 = vunpack.c.l.b16 %v89
  %v138 = vunpack.c.l.b16 %v90
  %v139 = vunpack.c.l.b16 %v91
  %v140 = vpack.c.b16 %v125, %v124
  %v141 = vpack.c.b16 %v127, %v126
  %v142 = vpack.c.b16 %v129, %v128
  %v143 = vpack.c.b16 %v131, %v130
  %v144 = vpack.c.b16 %v133, %v132
  %v145 = vpack.c.b16 %v135, %v134
  %v146 = vpack.c.b16 %v137, %v136
  %v147 = vpack.c.b16 %v139, %v138
  %156 = vmatpush.bf16.msra.mxu0 %v147
  %157 = vmatpush.bf16.msra.mxu0 %v146
  %158 = vmatpush.bf16.msra.mxu0 %v145
  %159 = vmatpush.bf16.msra.mxu0 %v144
  %160 = vmatpush.bf16.msra.mxu0 %v143
  %161 = vmatpush.bf16.msra.mxu0 %v142
  %162 = vmatpush.bf16.msra.mxu0 %v141
  %163 = vmatpush.bf16.msra.mxu0 %v140
  %164 = vmatmul.bf16.gmra.mxu0 %v68
  %v165 = vpop.f32.mrf.mxu0
  %v166 = vadd.f32 0.0, %v165
  %v167 = vpop.f32.mrf.mxu0
  %v168 = vadd.f32 0.0, %v167
  %169 = vmatmul.bf16.gmra.mxu0 %v69
  %v170 = vpop.f32.mrf.mxu0
  %v171 = vadd.f32 0.0, %v170
  %v172 = vpop.f32.mrf.mxu0
  %v173 = vadd.f32 0.0, %v172
  %174 = vmatmul.bf16.gmra.mxu0 %v70
  %v175 = vpop.f32.mrf.mxu0
  %v176 = vadd.f32 0.0, %v175
  %v177 = vpop.f32.mrf.mxu0
  %v178 = vadd.f32 0.0, %v177
  %179 = vmatmul.bf16.gmra.mxu0 %v71
  %v180 = vpop.f32.mrf.mxu0
  %v181 = vadd.f32 0.0, %v180
  %v182 = vpop.f32.mrf.mxu0
  %v183 = vadd.f32 0.0, %v182
  %184 = vmatmul.bf16.gmra.mxu0 %v72
  %v185 = vpop.f32.mrf.mxu0
  %v186 = vadd.f32 0.0, %v185
  %v187 = vpop.f32.mrf.mxu0
  %v188 = vadd.f32 0.0, %v187
  %189 = vmatmul.bf16.gmra.mxu0 %v73
  %v190 = vpop.f32.mrf.mxu0
  %v191 = vadd.f32 0.0, %v190
  %v192 = vpop.f32.mrf.mxu0
  %v193 = vadd.f32 0.0, %v192
  %194 = vmatmul.bf16.gmra.mxu0 %v74
  %v195 = vpop.f32.mrf.mxu0
  %v196 = vadd.f32 0.0, %v195
  %v197 = vpop.f32.mrf.mxu0
  %v198 = vadd.f32 0.0, %v197
  %199 = vmatmul.bf16.gmra.mxu0 %v75
  %v200 = vpop.f32.mrf.mxu0
  %v201 = vadd.f32 0.0, %v200
  %v202 = vpop.f32.mrf.mxu0
  %v203 = vadd.f32 0.0, %v202
  %204 = vdwg.mxu0
  %206 = vset.pattern.permute.xlu0 0
  %207 = vperm.xlu0 %206, %v92
  %v208 = vpop.permute.xlu0 %207
  %211 = vset.pattern.permute.xlu0 0
  %212 = vperm.xlu0 %211, %v93
  %v213 = vpop.permute.xlu0 %212
  %216 = vset.pattern.permute.xlu0 0
  %217 = vperm.xlu0 %216, %v94
  %v218 = vpop.permute.xlu0 %217
  %221 = vset.pattern.permute.xlu0 0
  %222 = vperm.xlu0 %221, %v95
  %v223 = vpop.permute.xlu0 %222
  %226 = vset.pattern.permute.xlu0 0
  %227 = vperm.xlu0 %226, %v96
  %v228 = vpop.permute.xlu0 %227
  %231 = vset.pattern.permute.xlu0 0
  %232 = vperm.xlu0 %231, %v97
  %v233 = vpop.permute.xlu0 %232
  %236 = vset.pattern.permute.xlu0 0
  %237 = vperm.xlu0 %236, %v98
  %v238 = vpop.permute.xlu0 %237
  %241 = vset.pattern.permute.xlu0 0
  %242 = vperm.xlu0 %241, %v99
  %v243 = vpop.permute.xlu0 %242
  %246 = vset.pattern.permute.xlu0 0
  %247 = vperm.xlu0 %246, %v100
  %v248 = vpop.permute.xlu0 %247
  %251 = vset.pattern.permute.xlu0 0
  %252 = vperm.xlu0 %251, %v101
  %v253 = vpop.permute.xlu0 %252
  %256 = vset.pattern.permute.xlu0 0
  %257 = vperm.xlu0 %256, %v102
  %v258 = vpop.permute.xlu0 %257
  %261 = vset.pattern.permute.xlu0 0
  %262 = vperm.xlu0 %261, %v103
  %v263 = vpop.permute.xlu0 %262
  %266 = vset.pattern.permute.xlu0 0
  %267 = vperm.xlu0 %266, %v104
  %v268 = vpop.permute.xlu0 %267
  %271 = vset.pattern.permute.xlu0 0
  %272 = vperm.xlu0 %271, %v105
  %v273 = vpop.permute.xlu0 %272
  %276 = vset.pattern.permute.xlu0 0
  %277 = vperm.xlu0 %276, %v106
  %v278 = vpop.permute.xlu0 %277
  %281 = vset.pattern.permute.xlu0 0
  %282 = vperm.xlu0 %281, %v107
  %v283 = vpop.permute.xlu0 %282
  %v285 = vmul.f32 %v166, %v208
  %v286 = vmul.f32 %v168, %v213
  %v287 = vmul.f32 %v171, %v218
  %v288 = vmul.f32 %v173, %v223
  %v289 = vmul.f32 %v176, %v228
  %v290 = vmul.f32 %v178, %v233
  %v291 = vmul.f32 %v181, %v238
  %v292 = vmul.f32 %v183, %v243
  %v293 = vmul.f32 %v186, %v248
  %v294 = vmul.f32 %v188, %v253
  %v295 = vmul.f32 %v191, %v258
  %v296 = vmul.f32 %v193, %v263
  %v297 = vmul.f32 %v196, %v268
  %v298 = vmul.f32 %v198, %v273
  %v299 = vmul.f32 %v201, %v278
  %v300 = vmul.f32 %v203, %v283
  %v301 = vpack.c.bf16 %v286, %v285
  %v302 = vpack.c.bf16 %v288, %v287
  %v303 = vpack.c.bf16 %v290, %v289
  %v304 = vpack.c.bf16 %v292, %v291
  %v305 = vpack.c.bf16 %v294, %v293
  %v306 = vpack.c.bf16 %v296, %v295
  %v307 = vpack.c.bf16 %v298, %v297
  %v308 = vpack.c.bf16 %v300, %v299
  %v309 = vld [vmem:[%s3] sm:$0xf]
  %v310 = vld [vmem:[%s3 + $0x4] sm:$0xf]
  %v311 = vld [vmem:[%s3 + $0x8] sm:$0xf]
  %v312 = vld [vmem:[%s3 + $0xc] sm:$0xf]
  %v313 = vld [vmem:[%s3 + $0x10] sm:$0xf]
  %v314 = vld [vmem:[%s3 + $0x14] sm:$0xf]
  %v315 = vld [vmem:[%s3 + $0x18] sm:$0xf]
  %v316 = vld [vmem:[%s3 + $0x1c] sm:$0xf]
  %v317 = vld [vmem:[%s3 + $0x20] sm:$0xf]
  %v318 = vld [vmem:[%s3 + $0x24] sm:$0xf]
  %v319 = vld [vmem:[%s3 + $0x28] sm:$0xf]
  %v320 = vld [vmem:[%s3 + $0x2c] sm:$0xf]
  %v321 = vld [vmem:[%s3 + $0x30] sm:$0xf]
  %v322 = vld [vmem:[%s3 + $0x34] sm:$0xf]
  %v323 = vld [vmem:[%s3 + $0x38] sm:$0xf]
  %v324 = vld [vmem:[%s3 + $0x3c] sm:$0xf]
  %v325 = vld [vmem:[%s4] sm:$0xf]
  %v326 = vld [vmem:[%s4 + $0x4] sm:$0xf]
  %v327 = vld [vmem:[%s4 + $0x8] sm:$0xf]
  %v328 = vld [vmem:[%s4 + $0xc] sm:$0xf]
  %v329 = vld [vmem:[%s4 + $0x10] sm:$0xf]
  %v330 = vld [vmem:[%s4 + $0x14] sm:$0xf]
  %v331 = vld [vmem:[%s4 + $0x18] sm:$0xf]
  %v332 = vld [vmem:[%s4 + $0x1c] sm:$0xf]
  %v333 = vld [vmem:[%s4 + $0x20] sm:$0xf]
  %v334 = vld [vmem:[%s4 + $0x24] sm:$0xf]
  %v335 = vld [vmem:[%s4 + $0x28] sm:$0xf]
  %v336 = vld [vmem:[%s4 + $0x2c] sm:$0xf]
  %v337 = vld [vmem:[%s4 + $0x30] sm:$0xf]
  %v338 = vld [vmem:[%s4 + $0x34] sm:$0xf]
  %v339 = vld [vmem:[%s4 + $0x38] sm:$0xf]
  %v340 = vld [vmem:[%s4 + $0x3c] sm:$0xf]
  %v357 = vunpack.c.l.b16 %v325
  %v358 = vunpack.c.l.b16 %v326
  %v359 = vunpack.c.l.b16 %v327
  %v360 = vunpack.c.l.b16 %v328
  %v361 = vunpack.c.l.b16 %v329
  %v362 = vunpack.c.l.b16 %v330
  %v363 = vunpack.c.l.b16 %v331
  %v364 = vunpack.c.l.b16 %v332
  %v365 = vunpack.c.l.b16 %v333
  %v366 = vunpack.c.l.b16 %v334
  %v367 = vunpack.c.l.b16 %v335
  %v368 = vunpack.c.l.b16 %v336
  %v369 = vunpack.c.l.b16 %v337
  %v370 = vunpack.c.l.b16 %v338
  %v371 = vunpack.c.l.b16 %v339
  %v372 = vunpack.c.l.b16 %v340
  %v373 = vpack.c.b16 %v358, %v357
  %v374 = vpack.c.b16 %v360, %v359
  %v375 = vpack.c.b16 %v362, %v361
  %v376 = vpack.c.b16 %v364, %v363
  %v377 = vpack.c.b16 %v366, %v365
  %v378 = vpack.c.b16 %v368, %v367
  %v379 = vpack.c.b16 %v370, %v369
  %v380 = vpack.c.b16 %v372, %v371
  %389 = vmatpush.bf16.msra.mxu0 %v380
  %390 = vmatpush.bf16.msra.mxu0 %v379
  %391 = vmatpush.bf16.msra.mxu0 %v378
  %392 = vmatpush.bf16.msra.mxu0 %v377
  %393 = vmatpush.bf16.msra.mxu0 %v376
  %394 = vmatpush.bf16.msra.mxu0 %v375
  %395 = vmatpush.bf16.msra.mxu0 %v374
  %396 = vmatpush.bf16.msra.mxu0 %v373
  %397 = vmatmul.bf16.gmra.mxu0 %v140
  %v398 = vpop.f32.mrf.mxu0
  %v399 = vadd.f32 0.0, %v398
  %v400 = vpop.f32.mrf.mxu0
  %v401 = vadd.f32 0.0, %v400
  %402 = vmatmul.bf16.gmra.mxu0 %v141
  %v403 = vpop.f32.mrf.mxu0
  %v404 = vadd.f32 0.0, %v403
  %v405 = vpop.f32.mrf.mxu0
  %v406 = vadd.f32 0.0, %v405
  %407 = vmatmul.bf16.gmra.mxu0 %v142
  %v408 = vpop.f32.mrf.mxu0
  %v409 = vadd.f32 0.0, %v408
  %v410 = vpop.f32.mrf.mxu0
  %v411 = vadd.f32 0.0, %v410
  %412 = vmatmul.bf16.gmra.mxu0 %v143
  %v413 = vpop.f32.mrf.mxu0
  %v414 = vadd.f32 0.0, %v413
  %v415 = vpop.f32.mrf.mxu0
  %v416 = vadd.f32 0.0, %v415
  %417 = vmatmul.bf16.gmra.mxu0 %v144
  %v418 = vpop.f32.mrf.mxu0
  %v419 = vadd.f32 0.0, %v418
  %v420 = vpop.f32.mrf.mxu0
  %v421 = vadd.f32 0.0, %v420
  %422 = vmatmul.bf16.gmra.mxu0 %v145
  %v423 = vpop.f32.mrf.mxu0
  %v424 = vadd.f32 0.0, %v423
  %v425 = vpop.f32.mrf.mxu0
  %v426 = vadd.f32 0.0, %v425
  %427 = vmatmul.bf16.gmra.mxu0 %v146
  %v428 = vpop.f32.mrf.mxu0
  %v429 = vadd.f32 0.0, %v428
  %v430 = vpop.f32.mrf.mxu0
  %v431 = vadd.f32 0.0, %v430
  %432 = vmatmul.bf16.gmra.mxu0 %v147
  %v433 = vpop.f32.mrf.mxu0
  %v434 = vadd.f32 0.0, %v433
  %v435 = vpop.f32.mrf.mxu0
  %v436 = vadd.f32 0.0, %v435
  %437 = vdwg.mxu0
  %v454 = vunpack.c.l.b16 %v309
  %v455 = vunpack.c.l.b16 %v310
  %v456 = vunpack.c.l.b16 %v311
  %v457 = vunpack.c.l.b16 %v312
  %v458 = vunpack.c.l.b16 %v313
  %v459 = vunpack.c.l.b16 %v314
  %v460 = vunpack.c.l.b16 %v315
  %v461 = vunpack.c.l.b16 %v316
  %v462 = vunpack.c.l.b16 %v317
  %v463 = vunpack.c.l.b16 %v318
  %v464 = vunpack.c.l.b16 %v319
  %v465 = vunpack.c.l.b16 %v320
  %v466 = vunpack.c.l.b16 %v321
  %v467 = vunpack.c.l.b16 %v322
  %v468 = vunpack.c.l.b16 %v323
  %v469 = vunpack.c.l.b16 %v324
  %v470 = vpack.c.b16 %v455, %v454
  %v471 = vpack.c.b16 %v457, %v456
  %v472 = vpack.c.b16 %v459, %v458
  %v473 = vpack.c.b16 %v461, %v460
  %v474 = vpack.c.b16 %v463, %v462
  %v475 = vpack.c.b16 %v465, %v464
  %v476 = vpack.c.b16 %v467, %v466
  %v477 = vpack.c.b16 %v469, %v468
  %486 = vmatpush.bf16.msra.mxu0 %v477
  %487 = vmatpush.bf16.msra.mxu0 %v476
  %488 = vmatpush.bf16.msra.mxu0 %v475
  %489 = vmatpush.bf16.msra.mxu0 %v474
  %490 = vmatpush.bf16.msra.mxu0 %v473
  %491 = vmatpush.bf16.msra.mxu0 %v472
  %492 = vmatpush.bf16.msra.mxu0 %v471
  %493 = vmatpush.bf16.msra.mxu0 %v470
  %494 = vmatmul.bf16.gmra.mxu0 %v301
  %v495 = vpop.f32.mrf.mxu0
  %v496 = vadd.f32 %v399, %v495
  %v497 = vpop.f32.mrf.mxu0
  %v498 = vadd.f32 %v401, %v497
  %499 = vmatmul.bf16.gmra.mxu0 %v302
  %v500 = vpop.f32.mrf.mxu0
  %v501 = vadd.f32 %v404, %v500
  %v502 = vpop.f32.mrf.mxu0
  %v503 = vadd.f32 %v406, %v502
  %504 = vmatmul.bf16.gmra.mxu0 %v303
  %v505 = vpop.f32.mrf.mxu0
  %v506 = vadd.f32 %v409, %v505
  %v507 = vpop.f32.mrf.mxu0
  %v508 = vadd.f32 %v411, %v507
  %509 = vmatmul.bf16.gmra.mxu0 %v304
  %v510 = vpop.f32.mrf.mxu0
  %v511 = vadd.f32 %v414, %v510
  %v512 = vpop.f32.mrf.mxu0
  %v513 = vadd.f32 %v416, %v512
  %514 = vmatmul.bf16.gmra.mxu0 %v305
  %v515 = vpop.f32.mrf.mxu0
  %v516 = vadd.f32 %v419, %v515
  %v517 = vpop.f32.mrf.mxu0
  %v518 = vadd.f32 %v421, %v517
  %519 = vmatmul.bf16.gmra.mxu0 %v306
  %v520 = vpop.f32.mrf.mxu0
  %v521 = vadd.f32 %v424, %v520
  %v522 = vpop.f32.mrf.mxu0
  %v523 = vadd.f32 %v426, %v522
  %524 = vmatmul.bf16.gmra.mxu0 %v307
  %v525 = vpop.f32.mrf.mxu0
  %v526 = vadd.f32 %v429, %v525
  %v527 = vpop.f32.mrf.mxu0
  %v528 = vadd.f32 %v431, %v527
  %529 = vmatmul.bf16.gmra.mxu0 %v308
  %v530 = vpop.f32.mrf.mxu0
  %v531 = vadd.f32 %v434, %v530
  %v532 = vpop.f32.mrf.mxu0
  %v533 = vadd.f32 %v436, %v532
  %534 = vdwg.mxu0
  %v535 = vld [vmem:[%s5] sm:$0x1]
  %v537 = vperm.slane %v535, 0
  %v539 = vadd.f32 %v496, %v537
  %v540 = vadd.f32 %v498, %v537
  %v541 = vadd.f32 %v501, %v537
  %v542 = vadd.f32 %v503, %v537
  %v543 = vadd.f32 %v506, %v537
  %v544 = vadd.f32 %v508, %v537
  %v545 = vadd.f32 %v511, %v537
  %v546 = vadd.f32 %v513, %v537
  %v547 = vadd.f32 %v516, %v537
  %v548 = vadd.f32 %v518, %v537
  %v549 = vadd.f32 %v521, %v537
  %v550 = vadd.f32 %v523, %v537
  %v551 = vadd.f32 %v526, %v537
  %v552 = vadd.f32 %v528, %v537
  %v553 = vadd.f32 %v531, %v537
  %v554 = vadd.f32 %v533, %v537
  %v555 = vmax.f32 %v539, 0.0
  %v556 = vmax.f32 %v540, 0.0
  %v557 = vmax.f32 %v541, 0.0
  %v558 = vmax.f32 %v542, 0.0
  %v559 = vmax.f32 %v543, 0.0
  %v560 = vmax.f32 %v544, 0.0
  %v561 = vmax.f32 %v545, 0.0
  %v562 = vmax.f32 %v546, 0.0
  %v563 = vmax.f32 %v547, 0.0
  %v564 = vmax.f32 %v548, 0.0
  %v565 = vmax.f32 %v549, 0.0
  %v566 = vmax.f32 %v550, 0.0
  %v567 = vmax.f32 %v551, 0.0
  %v568 = vmax.f32 %v552, 0.0
  %v569 = vmax.f32 %v553, 0.0
  %v570 = vmax.f32 %v554, 0.0
  %v571 = vpack.c.bf16 %v556, %v555
  %v572 = vpack.c.bf16 %v558, %v557
  %v573 = vpack.c.bf16 %v560, %v559
  %v574 = vpack.c.bf16 %v562, %v561
  %v575 = vpack.c.bf16 %v564, %v563
  %v576 = vpack.c.bf16 %v566, %v565
  %v577 = vpack.c.bf16 %v568, %v567
  %v578 = vpack.c.bf16 %v570, %v569
  %v579 = vld [vmem:[%s6] sm:$0xf]
  %v580 = vld [vmem:[%s6 + $0x4] sm:$0xf]
  %v581 = vld [vmem:[%s6 + $0x8] sm:$0xf]
  %v582 = vld [vmem:[%s6 + $0xc] sm:$0xf]
  %v583 = vld [vmem:[%s6 + $0x10] sm:$0xf]
  %v584 = vld [vmem:[%s6 + $0x14] sm:$0xf]
  %v585 = vld [vmem:[%s6 + $0x18] sm:$0xf]
  %v586 = vld [vmem:[%s6 + $0x1c] sm:$0xf]
  %v587 = vld [vmem:[%s6 + $0x20] sm:$0xf]
  %v588 = vld [vmem:[%s6 + $0x24] sm:$0xf]
  %v589 = vld [vmem:[%s6 + $0x28] sm:$0xf]
  %v590 = vld [vmem:[%s6 + $0x2c] sm:$0xf]
  %v591 = vld [vmem:[%s6 + $0x30] sm:$0xf]
  %v592 = vld [vmem:[%s6 + $0x34] sm:$0xf]
  %v593 = vld [vmem:[%s6 + $0x38] sm:$0xf]
  %v594 = vld [vmem:[%s6 + $0x3c] sm:$0xf]
  %v611 = vunpack.c.l.b16 %v579
  %v612 = vunpack.c.l.b16 %v580
  %v613 = vunpack.c.l.b16 %v581
  %v614 = vunpack.c.l.b16 %v582
  %v615 = vunpack.c.l.b16 %v583
  %v616 = vunpack.c.l.b16 %v584
  %v617 = vunpack.c.l.b16 %v585
  %v618 = vunpack.c.l.b16 %v586
  %v619 = vunpack.c.l.b16 %v587
  %v620 = vunpack.c.l.b16 %v588
  %v621 = vunpack.c.l.b16 %v589
  %v622 = vunpack.c.l.b16 %v590
  %v623 = vunpack.c.l.b16 %v591
  %v624 = vunpack.c.l.b16 %v592
  %v625 = vunpack.c.l.b16 %v593
  %v626 = vunpack.c.l.b16 %v594
  %v627 = vpack.c.b16 %v612, %v611
  %v628 = vpack.c.b16 %v614, %v613
  %v629 = vpack.c.b16 %v616, %v615
  %v630 = vpack.c.b16 %v618, %v617
  %v631 = vpack.c.b16 %v620, %v619
  %v632 = vpack.c.b16 %v622, %v621
  %v633 = vpack.c.b16 %v624, %v623
  %v634 = vpack.c.b16 %v626, %v625
  %643 = vmatpush.bf16.msra.mxu0 %v634
  %644 = vmatpush.bf16.msra.mxu0 %v633
  %645 = vmatpush.bf16.msra.mxu0 %v632
  %646 = vmatpush.bf16.msra.mxu0 %v631
  %647 = vmatpush.bf16.msra.mxu0 %v630
  %648 = vmatpush.bf16.msra.mxu0 %v629
  %649 = vmatpush.bf16.msra.mxu0 %v628
  %650 = vmatpush.bf16.msra.mxu0 %v627
  %651 = vmatmul.bf16.gmra.mxu0 %v571
  %v652 = vpop.f32.mrf.mxu0
  %v653 = vadd.f32 0.0, %v652
  %v654 = vpop.f32.mrf.mxu0
  %v655 = vadd.f32 0.0, %v654
  %656 = vmatmul.bf16.gmra.mxu0 %v572
  %v657 = vpop.f32.mrf.mxu0
  %v658 = vadd.f32 0.0, %v657
  %v659 = vpop.f32.mrf.mxu0
  %v660 = vadd.f32 0.0, %v659
  %661 = vmatmul.bf16.gmra.mxu0 %v573
  %v662 = vpop.f32.mrf.mxu0
  %v663 = vadd.f32 0.0, %v662
  %v664 = vpop.f32.mrf.mxu0
  %v665 = vadd.f32 0.0, %v664
  %666 = vmatmul.bf16.gmra.mxu0 %v574
  %v667 = vpop.f32.mrf.mxu0
  %v668 = vadd.f32 0.0, %v667
  %v669 = vpop.f32.mrf.mxu0
  %v670 = vadd.f32 0.0, %v669
  %671 = vmatmul.bf16.gmra.mxu0 %v575
  %v672 = vpop.f32.mrf.mxu0
  %v673 = vadd.f32 0.0, %v672
  %v674 = vpop.f32.mrf.mxu0
  %v675 = vadd.f32 0.0, %v674
  %676 = vmatmul.bf16.gmra.mxu0 %v576
  %v677 = vpop.f32.mrf.mxu0
  %v678 = vadd.f32 0.0, %v677
  %v679 = vpop.f32.mrf.mxu0
  %v680 = vadd.f32 0.0, %v679
  %681 = vmatmul.bf16.gmra.mxu0 %v577
  %v682 = vpop.f32.mrf.mxu0
  %v683 = vadd.f32 0.0, %v682
  %v684 = vpop.f32.mrf.mxu0
  %v685 = vadd.f32 0.0, %v684
  %686 = vmatmul.bf16.gmra.mxu0 %v578
  %v687 = vpop.f32.mrf.mxu0
  %v688 = vadd.f32 0.0, %v687
  %v689 = vpop.f32.mrf.mxu0
  %v690 = vadd.f32 0.0, %v689
  %691 = vdwg.mxu0
  %v692 = vld [vmem:[%s7] sm:$0xf]
  %v693 = vld [vmem:[%s7 + $0x4] sm:$0xf]
  %v694 = vld [vmem:[%s7 + $0x8] sm:$0xf]
  %v695 = vld [vmem:[%s7 + $0xc] sm:$0xf]
  %v696 = vld [vmem:[%s7 + $0x10] sm:$0xf]
  %v697 = vld [vmem:[%s7 + $0x14] sm:$0xf]
  %v698 = vld [vmem:[%s7 + $0x18] sm:$0xf]
  %v699 = vld [vmem:[%s7 + $0x1c] sm:$0xf]
  %v700 = vld [vmem:[%s7 + $0x20] sm:$0xf]
  %v701 = vld [vmem:[%s7 + $0x24] sm:$0xf]
  %v702 = vld [vmem:[%s7 + $0x28] sm:$0xf]
  %v703 = vld [vmem:[%s7 + $0x2c] sm:$0xf]
  %v704 = vld [vmem:[%s7 + $0x30] sm:$0xf]
  %v705 = vld [vmem:[%s7 + $0x34] sm:$0xf]
  %v706 = vld [vmem:[%s7 + $0x38] sm:$0xf]
  %v707 = vld [vmem:[%s7 + $0x3c] sm:$0xf]
  %v708 = vld [vmem:[%s8] sm:$0x1]
  %v710 = vperm.slane %v708, 0
  %v728 = vunpack.c.l.b16 %v692
  %v729 = vunpack.c.l.b16 %v693
  %v730 = vunpack.c.l.b16 %v694
  %v731 = vunpack.c.l.b16 %v695
  %v732 = vunpack.c.l.b16 %v696
  %v733 = vunpack.c.l.b16 %v697
  %v734 = vunpack.c.l.b16 %v698
  %v735 = vunpack.c.l.b16 %v699
  %v736 = vunpack.c.l.b16 %v700
  %v737 = vunpack.c.l.b16 %v701
  %v738 = vunpack.c.l.b16 %v702
  %v739 = vunpack.c.l.b16 %v703
  %v740 = vunpack.c.l.b16 %v704
  %v741 = vunpack.c.l.b16 %v705
  %v742 = vunpack.c.l.b16 %v706
  %v743 = vunpack.c.l.b16 %v707
  %v744 = vpack.c.b16 %v729, %v728
  %v745 = vpack.c.b16 %v731, %v730
  %v746 = vpack.c.b16 %v733, %v732
  %v747 = vpack.c.b16 %v735, %v734
  %v748 = vpack.c.b16 %v737, %v736
  %v749 = vpack.c.b16 %v739, %v738
  %v750 = vpack.c.b16 %v741, %v740
  %v751 = vpack.c.b16 %v743, %v742
  %760 = vmatpush.bf16.msra.mxu0 %v751
  %761 = vmatpush.bf16.msra.mxu0 %v750
  %762 = vmatpush.bf16.msra.mxu0 %v749
  %763 = vmatpush.bf16.msra.mxu0 %v748
  %764 = vmatpush.bf16.msra.mxu0 %v747
  %765 = vmatpush.bf16.msra.mxu0 %v746
  %766 = vmatpush.bf16.msra.mxu0 %v745
  %767 = vmatpush.bf16.msra.mxu0 %v744
  %768 = vmatmul.bf16.gmra.mxu0 %v571
  %v769 = vpop.f32.mrf.mxu0
  %v770 = vadd.f32 %v710, %v769
  %v771 = vpop.f32.mrf.mxu0
  %v772 = vadd.f32 %v710, %v771
  %773 = vmatmul.bf16.gmra.mxu0 %v572
  %v774 = vpop.f32.mrf.mxu0
  %v775 = vadd.f32 %v710, %v774
  %v776 = vpop.f32.mrf.mxu0
  %v777 = vadd.f32 %v710, %v776
  %778 = vmatmul.bf16.gmra.mxu0 %v573
  %v779 = vpop.f32.mrf.mxu0
  %v780 = vadd.f32 %v710, %v779
  %v781 = vpop.f32.mrf.mxu0
  %v782 = vadd.f32 %v710, %v781
  %783 = vmatmul.bf16.gmra.mxu0 %v574
  %v784 = vpop.f32.mrf.mxu0
  %v785 = vadd.f32 %v710, %v784
  %v786 = vpop.f32.mrf.mxu0
  %v787 = vadd.f32 %v710, %v786
  %788 = vmatmul.bf16.gmra.mxu0 %v575
  %v789 = vpop.f32.mrf.mxu0
  %v790 = vadd.f32 %v710, %v789
  %v791 = vpop.f32.mrf.mxu0
  %v792 = vadd.f32 %v710, %v791
  %793 = vmatmul.bf16.gmra.mxu0 %v576
  %v794 = vpop.f32.mrf.mxu0
  %v795 = vadd.f32 %v710, %v794
  %v796 = vpop.f32.mrf.mxu0
  %v797 = vadd.f32 %v710, %v796
  %798 = vmatmul.bf16.gmra.mxu0 %v577
  %v799 = vpop.f32.mrf.mxu0
  %v800 = vadd.f32 %v710, %v799
  %v801 = vpop.f32.mrf.mxu0
  %v802 = vadd.f32 %v710, %v801
  %803 = vmatmul.bf16.gmra.mxu0 %v578
  %v804 = vpop.f32.mrf.mxu0
  %v805 = vadd.f32 %v710, %v804
  %v806 = vpop.f32.mrf.mxu0
  %v807 = vadd.f32 %v710, %v806
  %808 = vdwg.mxu0
  %v809 = vpack.c.bf16 %v655, %v653
  %v810 = vpack.c.bf16 %v660, %v658
  %v811 = vpack.c.bf16 %v665, %v663
  %v812 = vpack.c.bf16 %v670, %v668
  %v813 = vpack.c.bf16 %v675, %v673
  %v814 = vpack.c.bf16 %v680, %v678
  %v815 = vpack.c.bf16 %v685, %v683
  %v816 = vpack.c.bf16 %v690, %v688
  %817 = vmatpush.bf16.msra.mxu0 %v816
  %818 = vmatpush.bf16.msra.mxu0 %v815
  %819 = vmatpush.bf16.msra.mxu0 %v814
  %820 = vmatpush.bf16.msra.mxu0 %v813
  %821 = vmatpush.bf16.msra.mxu0 %v812
  %822 = vmatpush.bf16.msra.mxu0 %v811
  %823 = vmatpush.bf16.msra.mxu0 %v810
  %824 = vmatpush.bf16.msra.mxu0 %v809
  %825 = vmatmul.bf16.gmra.mxu0 %v68
  %v826 = vpop.f32.mrf.mxu0
  %v827 = vadd.f32 0.0, %v826
  %v828 = vpop.f32.mrf.mxu0
  %v829 = vadd.f32 0.0, %v828
  %830 = vmatmul.bf16.gmra.mxu0 %v69
  %v831 = vpop.f32.mrf.mxu0
  %v832 = vadd.f32 0.0, %v831
  %v833 = vpop.f32.mrf.mxu0
  %v834 = vadd.f32 0.0, %v833
  %835 = vmatmul.bf16.gmra.mxu0 %v70
  %v836 = vpop.f32.mrf.mxu0
  %v837 = vadd.f32 0.0, %v836
  %v838 = vpop.f32.mrf.mxu0
  %v839 = vadd.f32 0.0, %v838
  %840 = vmatmul.bf16.gmra.mxu0 %v71
  %v841 = vpop.f32.mrf.mxu0
  %v842 = vadd.f32 0.0, %v841
  %v843 = vpop.f32.mrf.mxu0
  %v844 = vadd.f32 0.0, %v843
  %845 = vmatmul.bf16.gmra.mxu0 %v72
  %v846 = vpop.f32.mrf.mxu0
  %v847 = vadd.f32 0.0, %v846
  %v848 = vpop.f32.mrf.mxu0
  %v849 = vadd.f32 0.0, %v848
  %850 = vmatmul.bf16.gmra.mxu0 %v73
  %v851 = vpop.f32.mrf.mxu0
  %v852 = vadd.f32 0.0, %v851
  %v853 = vpop.f32.mrf.mxu0
  %v854 = vadd.f32 0.0, %v853
  %855 = vmatmul.bf16.gmra.mxu0 %v74
  %v856 = vpop.f32.mrf.mxu0
  %v857 = vadd.f32 0.0, %v856
  %v858 = vpop.f32.mrf.mxu0
  %v859 = vadd.f32 0.0, %v858
  %860 = vmatmul.bf16.gmra.mxu0 %v75
  %v861 = vpop.f32.mrf.mxu0
  %v862 = vadd.f32 0.0, %v861
  %v863 = vpop.f32.mrf.mxu0
  %v864 = vadd.f32 0.0, %v863
  %865 = vdwg.mxu0
  %v866 = vmul.f32 %v827, %v208
  %v867 = vmul.f32 %v829, %v213
  %v868 = vmul.f32 %v832, %v218
  %v869 = vmul.f32 %v834, %v223
  %v870 = vmul.f32 %v837, %v228
  %v871 = vmul.f32 %v839, %v233
  %v872 = vmul.f32 %v842, %v238
  %v873 = vmul.f32 %v844, %v243
  %v874 = vmul.f32 %v847, %v248
  %v875 = vmul.f32 %v849, %v253
  %v876 = vmul.f32 %v852, %v258
  %v877 = vmul.f32 %v854, %v263
  %v878 = vmul.f32 %v857, %v268
  %v879 = vmul.f32 %v859, %v273
  %v880 = vmul.f32 %v862, %v278
  %v881 = vmul.f32 %v864, %v283
  %v882 = vadd.f32 %v866, %v770
  %v883 = vadd.f32 %v867, %v772
  %v884 = vadd.f32 %v868, %v775
  %v885 = vadd.f32 %v869, %v777
  %v886 = vadd.f32 %v870, %v780
  %v887 = vadd.f32 %v871, %v782
  %v888 = vadd.f32 %v872, %v785
  %v889 = vadd.f32 %v873, %v787
  %v890 = vadd.f32 %v874, %v790
  %v891 = vadd.f32 %v875, %v792
  %v892 = vadd.f32 %v876, %v795
  %v893 = vadd.f32 %v877, %v797
  %v894 = vadd.f32 %v878, %v800
  %v895 = vadd.f32 %v879, %v802
  %v896 = vadd.f32 %v880, %v805
  %v897 = vadd.f32 %v881, %v807
  %898 = vst [vmem:[%s9] sm:$0xff] %v882
  %899 = vst [vmem:[%s9 + $0x8] sm:$0xff] %v883
  %900 = vst [vmem:[%s9 + $0x10] sm:$0xff] %v884
  %901 = vst [vmem:[%s9 + $0x18] sm:$0xff] %v885
  %902 = vst [vmem:[%s9 + $0x20] sm:$0xff] %v886
  %903 = vst [vmem:[%s9 + $0x28] sm:$0xff] %v887
  %904 = vst [vmem:[%s9 + $0x30] sm:$0xff] %v888
  %905 = vst [vmem:[%s9 + $0x38] sm:$0xff] %v889
  %906 = vst [vmem:[%s9 + $0x40] sm:$0xff] %v890
  %907 = vst [vmem:[%s9 + $0x48] sm:$0xff] %v891
  %908 = vst [vmem:[%s9 + $0x50] sm:$0xff] %v892
  %909 = vst [vmem:[%s9 + $0x58] sm:$0xff] %v893
  %910 = vst [vmem:[%s9 + $0x60] sm:$0xff] %v894
  %911 = vst [vmem:[%s9 + $0x68] sm:$0xff] %v895
  %912 = vst [vmem:[%s9 + $0x70] sm:$0xff] %v896
  %913 = vst [vmem:[%s9 + $0x78] sm:$0xff] %v897
  // Predicated region
  $region38: #{cluster_gcn_forward.1} parent=0 // pred_check
    _
  $region39: #{cluster_gcn_forward.1} parent=0 // pred_check_branch
    %915 = sbr.rel (0) target = $region41
  $region40: #{cluster_gcn_forward.1} parent=0 // pred_region
    _
  $region41: #{cluster_gcn_forward.1} parent=0 // pred_fallthru
    _
  // Predicated region
  $region42: #{cluster_gcn_forward.1} parent=0 // pred_check
    _
  $region43: #{cluster_gcn_forward.1} parent=0 // pred_check_branch
    %917 = sbr.rel (0) target = $region45
  $region44: #{cluster_gcn_forward.1} parent=0 // pred_region
    _
  $region45: #{cluster_gcn_forward.1} parent=0 // pred_fallthru
    _

</llo_original>
